<compile_context>
chip_gen: v7x
topology: tpu7x:2x2x1
jax: 0.10.0
libtpu: 0.0.40
codegen_flags: <defaults>
</compile_context>

<pallas_src>
import jax
import jax.numpy as jnp
from jax.experimental import pallas as pl
from jax.experimental.pallas import tpu as pltpu

_NEG = -1e30  # finite "minus infinity": exp() underflows to exactly 0, no NaNs from padding


def _round_up(x, m):
    return ((x + m - 1) // m) * m


def _device_kind():
    try:
        return jax.devices()[0].device_kind.lower()
    except Exception:
        return ""


def _mxu_granularity():
    kind = _device_kind()
    for old in ("v2", "v3", "v4", "v5"):
        if old in kind:
            return 128            # 128x128 MXU generations (incl. v5e)
    return 256                    # v6e / v7x native 256x256 tile


def _num_tensorcores():
    if "v7" in _device_kind():
        return 2
    try:
        return max(1, int(getattr(jax.devices()[0], "num_cores", 1) or 1))
    except Exception:
        return 1


def _vmem_config():
    """Generation-aware (tile-picker budget, vmem_limit_bytes)."""
    cap = 64 << 20
    try:
        info = pltpu.get_tpu_info()
        cap = int(getattr(info, "vmem_capacity_bytes", cap) or cap)
    except Exception:
        pass
    if "v7" in _device_kind():
        cap = min(cap, 64 << 20)                       # 64 MiB per TensorCore on v7x
    limit = max(24 << 20, min(cap - (8 << 20), 100 << 20))
    budget = max(12 << 20, min(int(limit * 0.72), 64 << 20))
    return budget, limit


def _pick_tile_b(B, Dp, Cp, *, needs_teacher, two_logit_streams, live_f32_tiles,
                 budget_bytes):
    """Largest batch tile (multiple of 8) whose working set fits the VMEM budget."""
    # Grid-invariant teacher params: bf16 weight + f32 bias, single-buffered.
    fixed = (Dp * Cp * 2 + Cp * 4) if needs_teacher else 0
    n_logit_streams = 2 if two_logit_streams else 1
    best = 8
    for cand in (1024, 768, 512, 384, 256, 128, 64, 32, 16, 8):
        streams = cand * Cp * 4 * n_logit_streams * 2            # f32 logits, double-buffered
        if needs_teacher:
            streams += cand * Dp * 2 * 2                         # bf16 teacher inputs
        streams += cand * 4 * 2 + 8 * 128 * 4 * 2                # labels + partial tile
        scratch = cand * Cp * 4 * live_f32_tiles                 # live in-kernel f32 temporaries
        if fixed + streams + scratch <= budget_bytes:
            best = cand
            break
    return min(best, _round_up(max(B, 1), 8))


def _resident_spec(shape):
    """Grid-invariant block: single-buffered (default double-buffering wastes VMEM)."""
    index_map = lambda i: (0, 0)
    try:
        return pl.BlockSpec(shape, index_map, pipeline_mode=pl.Buffered(1))
    except Exception:  # pipeline_mode / Buffered unavailable: keep default buffering
        return pl.BlockSpec(shape, index_map)


# ---------------------------------------------------------------------------
# Fused kernel factory: teacher forward + base CE + (soft KL | hard CE) partials
# ---------------------------------------------------------------------------
def _make_kernel(distillation_type, has_kd_stream, inv_tau, n_classes, n_rows):
    needs_teacher = distillation_type != "none"

    def kernel(*refs):
        it = iter(refs)
        out_s_ref = next(it)                                # (tB, Cp) student logits (f32)
        kd_ref = next(it) if has_kd_stream else out_s_ref   # (tB, Cp) distill-head logits
        if needs_teacher:
            x_ref = next(it)                                 # (tB, Dp) teacher inputs (bf16)
            w_ref = next(it)                                 # (Dp, Cp) teacher weight (bf16, resident)
            b_ref = next(it)                                 # (1, Cp)  teacher bias (f32, resident)
        lab_ref = next(it)                                   # (tB, 1) int32
        part_ref = next(it)                                  # (8, 128) f32 partial sums

        tile = pl.program_id(0)
        outputs = out_s_ref[...]
        labels = lab_ref[...]
        tB, Cp = outputs.shape

        col = jax.lax.broadcasted_iota(jnp.int32, (tB, Cp), 1)
        row = jax.lax.broadcasted_iota(jnp.int32, (tB, 1), 0) + tile * tB
        row_valid = (row < n_rows).astype(jnp.float32)       # mask padded batch rows

        # ---- base criterion: CrossEntropy(outputs, labels), summed over tile rows ----
        # per-row CE = logsumexp(x) - x[label]; padded class columns hold -1e30 so their
        # exp() is exactly 0 and they never win the label select.
        m_o = jnp.max(outputs, axis=1, keepdims=True)
        lse_o = m_o + jnp.log(jnp.sum(jnp.exp(outputs - m_o), axis=1, keepdims=True))
        picked = jnp.sum(jnp.where(col == labels, outputs, 0.0), axis=1, keepdims=True)
        base_partial = jnp.sum((lse_o - picked) * row_valid)

        dist_partial = jnp.float32(0.0)

        if needs_teacher:
            kd = kd_ref[...] if has_kd_stream else outputs
            # Fused teacher forward: logits = x @ W + b (bf16 MXU, f32 accumulate);
            # x / W were pre-cast to bf16 in the wrapper -> no per-step VPU cast here.
            teacher = (
                jnp.dot(x_ref[...], w_ref[...], preferred_element_type=jnp.float32)
                + b_ref[...]
            )

            if distillation_type == "soft":
                # <=4 live (tB, Cp) f32 temporaries: a (shifted teacher), b (shifted
                # student), e_t, and the fused product inside the row reduction.
                a = teacher * inv_tau
                a = a - jnp.max(a, axis=1, keepdims=True)
                b = kd * inv_tau
                b = b - jnp.max(b, axis=1, keepdims=True)
                e_t = jnp.exp(a)
                z_t = jnp.sum(e_t, axis=1, keepdims=True)
                z_k = jnp.sum(jnp.exp(b), axis=1, keepdims=True)
                # Padded columns: teacher logit = -1e30 -> e_t == 0 exactly, so they drop
                # out of both sums; no column mask needed.  Exact (tB,1) divides, no
                # approximate reciprocal, for parity with the torch reference.
                cross = jnp.sum(e_t * (a - b), axis=1, keepdims=True)
                kl_rows = cross / z_t + (jnp.log(z_k) - jnp.log(z_t))
                dist_partial = jnp.sum(kl_rows * row_valid)
            else:  # "hard": CE(kd, argmax(teacher)); first-max tie-break like torch.argmax
                t_max = jnp.max(teacher, axis=1, keepdims=True)
                t_arg = jnp.min(
                    jnp.where(teacher == t_max, col, jnp.int32(Cp)),
                    axis=1, keepdims=True,
                )
                m_k = jnp.max(kd, axis=1, keepdims=True)
                lse_k = m_k + jnp.log(jnp.sum(jnp.exp(kd - m_k), axis=1, keepdims=True))
                picked_k = jnp.sum(jnp.where(col == t_arg, kd, 0.0), axis=1, keepdims=True)
                dist_partial = jnp.sum((lse_k - picked_k) * row_valid)

        # Lane-dense (8, 128) partial tile: lane 0 = base CE sum, lane 1 = distill sum.
        # Single lane-iota + two selects; duplicate sublanes are ignored by the reducer.
        lane = jax.lax.broadcasted_iota(jnp.int32, (8, 128), 1)
        part_ref[...] = jnp.where(
            lane == 0, base_partial, jnp.where(lane == 1, dist_partial, 0.0)
        )

    return kernel


# ---------------------------------------------------------------------------
# Wrapper: padding, tiling, pallas_call, final blend
# ---------------------------------------------------------------------------
def distillation_loss(inputs, outputs, labels, teacher_w, teacher_b, *,
                      distillation_type="soft", alpha=0.5, tau=1.0):
    """JAX/Pallas equivalent of DistillationLoss.forward
    (ancestor := Linear(D->C), base_criterion := mean CrossEntropy)."""
    assert distillation_type in ("none", "soft", "hard")
    kd_shared = True
    if isinstance(outputs, (tuple, list)):
        outputs, outputs_kd = outputs
        kd_shared = outputs_kd is outputs
    else:
        outputs_kd = outputs
    if distillation_type == "soft":
        # -1e30 class padding is scaled by 1/tau inside the kernel; keep it finite in f32.
        assert 1e-6 <= float(tau) <= 1e6, "tau outside supported range for padded logits"

    outputs = outputs.astype(jnp.float32)
    labels = jnp.asarray(labels).reshape(-1).astype(jnp.int32)
    B, C = outputs.shape

    needs_teacher = distillation_type != "none"
    has_kd_stream = needs_teacher and not kd_shared

    gran = _mxu_granularity()
    Cp = _round_up(C, gran)                                  # lane-dense class axis
    D = inputs.shape[1] if needs_teacher else 0
    Dp = _round_up(D, gran) if needs_teacher else 0          # MXU-aligned contraction axis

    budget, vmem_limit = _vmem_config()
    live = {"none": 3, "hard": 5, "soft": 6}[distillation_type]
    tB = _pick_tile_b(B, Dp, Cp, needs_teacher=needs_teacher,
                      two_logit_streams=has_kd_stream,
                      live_f32_tiles=live, budget_bytes=budget)
    # Multi-TensorCore chips (v7x): make sure the "parallel" batch axis has >= #cores tiles.
    num_tc = _num_tensorcores()
    while num_tc > 1 and -(-B // tB) < num_tc and tB > 8:
        tB = max(8, _round_up(tB // 2, 8))
    Bp = _round_up(B, tB)
    n_tiles = Bp // tB

    def pad_logits(a):
        a = jnp.pad(a.astype(jnp.float32), ((0, 0), (0, Cp - C)), constant_values=_NEG)
        return jnp.pad(a, ((0, Bp - B), (0, 0)))             # padded rows (masked in kernel)

    args = [pad_logits(outputs)]
    in_specs = [pl.BlockSpec((tB, Cp), lambda i: (i, 0))]     # student logits

    if has_kd_stream:                                         # only when kd differs from outputs
        args.append(pad_logits(outputs_kd))
        in_specs.append(pl.BlockSpec((tB, Cp), lambda i: (i, 0)))

    if needs_teacher:
        # Teacher path runs under stop_gradient (torch.no_grad); pre-cast x / W to bf16 so
        # the streams move half the HBM bytes and W's resident VMEM footprint is halved.
        x = jax.lax.stop_gradient(inputs.astype(jnp.float32))
        w = jax.lax.stop_gradient(teacher_w.astype(jnp.float32))
        bias = jax.lax.stop_gradient(teacher_b.astype(jnp.float32)).reshape(1, C)
        x_p = jnp.pad(x, ((0, Bp - B), (0, Dp - D))).astype(jnp.bfloat16)
        w_p = jnp.pad(w, ((0, Dp - D), (0, Cp - C))).astype(jnp.bfloat16)
        b_p = jnp.pad(bias, ((0, 0), (0, Cp - C)), constant_values=_NEG)  # f32, tiny
        args += [x_p, w_p, b_p]
        in_specs += [
            pl.BlockSpec((tB, Dp), lambda i: (i, 0)),          # teacher inputs (streamed)
            _resident_spec((Dp, Cp)),                          # teacher weight (resident)
            _resident_spec((1, Cp)),                           # teacher bias (resident)
        ]

    args.append(jnp.pad(labels.reshape(B, 1), ((0, Bp - B), (0, 0))))
    in_specs.append(pl.BlockSpec((tB, 1), lambda i: (i, 0)))

    # Variant-aware cost hint for the XLA scheduler (no teacher flops on the 'none' path).
    flops = 12 * Bp * Cp
    transc = 2 * Bp * Cp
    bytes_accessed = 4 * Bp * Cp + 4 * Bp + n_tiles * 8 * 128 * 4
    if needs_teacher:
        flops += 2 * Bp * Dp * Cp + 10 * Bp * Cp
        transc += 2 * Bp * Cp
        bytes_accessed += 2 * Bp * Dp + 2 * Dp * Cp + 4 * Cp
        if has_kd_stream:
            bytes_accessed += 4 * Bp * Cp
    cost = pl.CostEstimate(flops=int(flops), transcendentals=int(transc),
                           bytes_accessed=int(bytes_accessed))

    kernel = _make_kernel(distillation_type, has_kd_stream, float(1.0 / tau), C, B)

    partials = pl.pallas_call(
        kernel,
        out_shape=jax.ShapeDtypeStruct((n_tiles * 8, 128), jnp.float32),
        grid=(n_tiles,),
        in_specs=in_specs,
        out_specs=pl.BlockSpec((8, 128), lambda i: (i, 0)),
        compiler_params=pltpu.CompilerParams(
            dimension_semantics=("parallel",),
            vmem_limit_bytes=int(vmem_limit),
        ),
        cost_estimate=cost,
    )(*args)

    # Tiny trailing reduction + alpha/tau blend kept in JAX (batch axis stays parallel).
    parts = partials.reshape(n_tiles, 8, 128)
    base_loss = jnp.sum(parts[:, 0, 0]) / B
    if distillation_type == "none":
        return base_loss
    dist_sum = jnp.sum(parts[:, 0, 1])
    if distillation_type == "soft":
        # F.kl_div(..., reduction='sum', log_target=True) * T^2 / outputs_kd.numel()
        distill_loss = dist_sum * (tau * tau) / (B * C)
    else:  # "hard": cross_entropy(outputs_kd, teacher.argmax(1)), mean over batch
        distill_loss = dist_sum / B
    return base_loss * (1.0 - alpha) + distill_loss * alpha


# ---------------------------------------------------------------------------
# Demo
# ---------------------------------------------------------------------------
if __name__ == "__main__":
    B, D, C = 8, 32, 16  # batch, feature dim, num classes
    key = jax.random.PRNGKey(0)
    k_in, k_out, k_kd, k_lab, k_w, k_b = jax.random.split(key, 6)

    inputs = jax.random.normal(k_in, (B, D), dtype=jnp.float32)
    student_logits = jax.random.normal(k_out, (B, C), dtype=jnp.float32)
    student_kd_logits = jax.random.normal(k_kd, (B, C), dtype=jnp.float32)
    labels = jax.random.randint(k_lab, (B,), 0, C, dtype=jnp.int32)

    # Deterministic ancestor (teacher) Linear(D -> C) parameters.
    teacher_w = jax.random.normal(k_w, (D, C), dtype=jnp.float32) * 0.1
    teacher_b = jax.random.normal(k_b, (C,), dtype=jnp.float32) * 0.1

    for dt in ("none", "soft", "hard"):
        loss = distillation_loss(
            inputs,
            (student_logits, student_kd_logits),
            labels,
            teacher_w,
            teacher_b,
            distillation_type=dt,
            alpha=0.5,
            tau=3.0,
        )
        jax.block_until_ready(loss)

    # Non-tuple call path: outputs_kd is outputs -> single logits stream variant.
    loss = distillation_loss(
        inputs, student_logits, labels, teacher_w, teacher_b,
        distillation_type="soft", alpha=0.5, tau=3.0,
    )
    jax.block_until_ready(loss)

    print("KERNEL_OK")
</pallas_src>

<mosaic_0001>
module attributes {stable_mosaic.version = 11 : i64} {
  func.func @kernel(%arg0: i32, %arg1: memref<8x256xf32, #tpu.memory_space<vmem>>, %arg2: memref<8x1xi32, #tpu.memory_space<vmem>>, %arg3: memref<8x128xf32, #tpu.memory_space<vmem>>) attributes {dimension_semantics = [#tpu.dimension_semantics<parallel>], iteration_bounds = array<i64: 1>, scalar_prefetch = 0 : i64, scratch_operands = 0 : i64, tpu.core_type = #tpu.core_type<tc>, window_params = [{transform_indices = @transform_0, window_bounds = array<i64: 8, 256>}, {transform_indices = @transform_1, window_bounds = array<i64: 8, 1>}, {transform_indices = @transform_2, window_bounds = array<i64: 8, 128>}]} {
    %c0 = arith.constant 0 : index
    %c0_0 = arith.constant 0 : index
    %0 = vector.load %arg1[%c0, %c0_0] : memref<8x256xf32, #tpu.memory_space<vmem>>, vector<8x256xf32>
    %c0_1 = arith.constant 0 : index
    %c0_2 = arith.constant 0 : index
    %1 = vector.load %arg2[%c0_1, %c0_2] : memref<8x1xi32, #tpu.memory_space<vmem>>, vector<8x1xi32>
    %2 = tpu.iota {dimensions = array<i32: 1>} : vector<8x256xi32>
    %3 = tpu.iota {dimensions = array<i32: 0>} : vector<8x1xi32>
    %c8_i32 = arith.constant 8 : i32
    %4 = arith.muli %arg0, %c8_i32 : i32
    %5 = vector.broadcast %4 : i32 to vector<8x1xi32>
    %6 = arith.addi %3, %5 : vector<8x1xi32>
    %c8_i32_3 = arith.constant 8 : i32
    %7 = vector.broadcast %c8_i32_3 : i32 to vector<8x1xi32>
    %8 = arith.cmpi slt, %6, %7 : vector<8x1xi32>
    %9 = arith.extui %8 : vector<8x1xi1> to vector<8x1xi32>
    %10 = arith.sitofp %9 : vector<8x1xi32> to vector<8x1xf32>
    %cst = arith.constant dense<0xFF800000> : vector<8xf32>
    %11 = vector.multi_reduction <maximumf>, %0, %cst [1] : vector<8x256xf32> to vector<8xf32>
    %12 = vector.shape_cast %11 : vector<8xf32> to vector<8x1xf32>
    %13 = vector.broadcast %12 : vector<8x1xf32> to vector<8x256xf32>
    %14 = arith.subf %0, %13 : vector<8x256xf32>
    %15 = math.exp %14 : vector<8x256xf32>
    %cst_4 = arith.constant dense<0.000000e+00> : vector<8xf32>
    %16 = vector.multi_reduction <add>, %15, %cst_4 [1] : vector<8x256xf32> to vector<8xf32>
    %17 = vector.shape_cast %16 : vector<8xf32> to vector<8x1xf32>
    %18 = math.log %17 : vector<8x1xf32>
    %19 = arith.addf %12, %18 : vector<8x1xf32>
    %20 = vector.broadcast %1 : vector<8x1xi32> to vector<8x256xi32>
    %21 = arith.cmpi eq, %2, %20 : vector<8x256xi32>
    %cst_5 = arith.constant 0.000000e+00 : f32
    %22 = vector.broadcast %cst_5 : f32 to vector<8x256xf32>
    %23 = arith.select %21, %0, %22 : vector<8x256xi1>, vector<8x256xf32>
    %cst_6 = arith.constant dense<0.000000e+00> : vector<8xf32>
    %24 = vector.multi_reduction <add>, %23, %cst_6 [1] : vector<8x256xf32> to vector<8xf32>
    %25 = vector.shape_cast %24 : vector<8xf32> to vector<8x1xf32>
    %26 = arith.subf %19, %25 : vector<8x1xf32>
    %27 = arith.mulf %26, %10 : vector<8x1xf32>
    %28 = vector.shape_cast %27 : vector<8x1xf32> to vector<1x8x1xf32>
    %cst_7 = arith.constant dense<0.000000e+00> : vector<1xf32>
    %29 = vector.multi_reduction <add>, %28, %cst_7 [1, 2] : vector<1x8x1xf32> to vector<1xf32>
    %30 = vector.shape_cast %29 : vector<1xf32> to vector<1x1x1xf32>
    %31 = vector.extract %30[0, 0, 0] : f32 from vector<1x1x1xf32>
    %32 = tpu.iota {dimensions = array<i32: 1>} : vector<8x128xi32>
    %c0_i32 = arith.constant 0 : i32
    %33 = vector.broadcast %c0_i32 : i32 to vector<8x128xi32>
    %34 = arith.cmpi eq, %32, %33 : vector<8x128xi32>
    %c1_i32 = arith.constant 1 : i32
    %35 = vector.broadcast %c1_i32 : i32 to vector<8x128xi32>
    %36 = arith.cmpi eq, %32, %35 : vector<8x128xi32>
    %cst_8 = arith.constant 0.000000e+00 : f32
    %cst_9 = arith.constant 0.000000e+00 : f32
    %37 = vector.broadcast %cst_8 : f32 to vector<8x128xf32>
    %38 = vector.broadcast %cst_9 : f32 to vector<8x128xf32>
    %39 = arith.select %36, %37, %38 : vector<8x128xi1>, vector<8x128xf32>
    %40 = vector.broadcast %31 : f32 to vector<8x128xf32>
    %41 = arith.select %34, %40, %39 : vector<8x128xi1>, vector<8x128xf32>
    %c0_10 = arith.constant 0 : index
    %c0_11 = arith.constant 0 : index
    %42 = vector.load %arg3[%c0_10, %c0_11] : memref<8x128xf32, #tpu.memory_space<vmem>>, vector<8x128xf32>
    tpu.vector_store %arg3[%c0_10, %c0_11], %41 {strides = array<i32>} : memref<8x128xf32, #tpu.memory_space<vmem>>, vector<8x128xf32>,
    return
  }
  func.func @transform_0(%arg0: i32) -> (i32, i32) {
    %c0_i32 = arith.constant 0 : i32
    %c0_i32_0 = arith.constant 0 : i32
    return %arg0, %c0_i32 : i32, i32
  }
  func.func @transform_1(%arg0: i32) -> (i32, i32) {
    %c0_i32 = arith.constant 0 : i32
    %c0_i32_0 = arith.constant 0 : i32
    return %arg0, %c0_i32 : i32, i32
  }
  func.func @transform_2(%arg0: i32) -> (i32, i32) {
    %c0_i32 = arith.constant 0 : i32
    %c0_i32_0 = arith.constant 0 : i32
    return %arg0, %c0_i32 : i32, i32
  }
}

</mosaic_0001>

<llo_original>
// kernel: tpu_custom_call.1
$region0: #{tpu_custom_call.1}
  #allocation0 [shape = 'u32[]', space=smem, size = 0x4, offset = 0x4, fixed_abs, tag = 'smem constant byte address 0x4 - core index']
  #allocation1 [shape = 'u32[144,128]{1,0:T(1,128)}', space=vmem, size = 0x12000, scoped, tag = 'internal scratch']
  %s0 = inlined_call_operand.hbm [shape: f32[8,256], index: 0, kind: input, shape index: {}]
  %s1 = inlined_call_operand.vmem [shape: s32[8,1], index: 1, kind: input, shape index: {}]
  %s2 = inlined_call_operand.hbm [shape: f32[8,128], index: 2, kind: output, shape index: {}]
  %s3 = sld [smem:[#allocation0]]
  $region22: #{tpu_custom_call.1} parent=0
    _
  %s5 = ssub.s32 1, %s3
  %s6 = scalar_select 0, %s5, %s3
  $region1: #{tpu_custom_call.1} parent=0
    #allocation2 [shape = 'u8[8192]{0}', space=vmem, size = 0x2000, scoped, tag = 'input window, operand 0, single buffered']
    #allocation3 [shape = 's32[1]{0}', space=sflag, size = 0x4, scoped, tag = 'scoped memory for tpu_custom_call.1']
    #allocation4 [shape = 's32[1]{0}', space=sflag, size = 0x4, scoped, tag = 'scoped memory for tpu_custom_call.1']
    #allocation5 [shape = 'u8[4096]{0}', space=vmem, size = 0x1000, scoped, tag = 'output window, operand 0, single buffered']
    %7 = vsyncpa [#allocation3], 0
    %8 = vsyncpa [#allocation4], 0
    // Predicated region
    $region2: #{tpu_custom_call.1} parent=1 // pred_check
      _
    $region3: #{tpu_custom_call.1} parent=1 // pred_check_branch
      %10 = sbr.rel (0) target = $region5
    $region4: #{tpu_custom_call.1} parent=1 // pred_region
      %s12 = ssub.s32 256, 256
      %13 = vsyncadd [#allocation3], %s12
      %s15 = sshll.u32 [#allocation2], 4
      %s16 = int_to_ptr.vmem [resolvable:$true] %s15
      %18 = dma.hbm_to_vmem [thread:$0]  %s0, 256, %s16, [#allocation3]
    $region5: #{tpu_custom_call.1} parent=1 // pred_fallthru
      _
    // Predicated region
    $region6: #{tpu_custom_call.1} parent=1 // pred_check
      _
    $region7: #{tpu_custom_call.1} parent=1 // pred_check_branch
      %20 = sbr.rel (0) target = $region9
    $region8: #{tpu_custom_call.1} parent=1 // pred_region
      _
    $region9: #{tpu_custom_call.1} parent=1 // pred_fallthru
      _
    // Predicated region
    $region10: #{tpu_custom_call.1} parent=1 // pred_check
      _
    $region11: #{tpu_custom_call.1} parent=1 // pred_check_branch
      %22 = sbr.rel (0) target = $region13
    $region12: #{tpu_custom_call.1} parent=1 // pred_region
      %23 = dma.done [#allocation3], 256
    $region13: #{tpu_custom_call.1} parent=1 // pred_fallthru
      _
    %v24 = vld [vmem:[#allocation2] sm:$0xff]
    %v25 = vld [vmem:[#allocation2 + $0x8] sm:$0xff]
    %v26 = vld [vmem:[%s1] sm:$0xff]
    %v27 = vlaneseq
    %v28 = vand.u32 %v27, 127
    %v29 = vadd.s32 %v28, 128
    %v30 = vlaneseq
    %v31 = vshrl.u32 %v30, 7
    %s32 = smul.u32 0, 8
    %v33 = vstv %s32
    %v34 = vadd.s32 %v31, %v33
    %vm35 = vcmp.lt.s32.totalorder %v34, 8
    %v36 = vsel %vm35, 1, 0
    %v37 = vcvt.s32.f32 %v36
    %v38 = vmax.f32 %v24, %v25
    %39 = vmax.xlane.f32.xlu0 %v38
    %v40 = vpop.xlane.xlu0 %39
    %v41 = vsub.f32 %v24, %v40
    %v42 = vsub.f32 %v25, %v40
    %v43 = vmul.f32 %v41, 1.442695
    %v44 = vpow.pop %v43
    %v45 = vmul.f32 %v42, 1.442695
    %v46 = vpow.pop %v45
    %v47 = vadd.f32 %v44, %v46
    %48 = vadd.xlane.f32.xlu0 %v47
    %v49 = vpop.xlane.xlu0 %48
    %v50 = vlog2.pop %v49
    %v51 = vmul.f32 %v50, 0.6931472
    %v52 = vadd.f32 %v40, %v51
    %53 = vset.pattern.permute.xlu0 0
    %54 = vperm.xlu0 %53, %v26
    %v55 = vpop.permute.xlu0 %54
    %vm56 = vcmp.eq.s32.totalorder %v28, %v55
    %vm57 = vcmp.eq.s32.totalorder %v29, %v55
    %v58 = vsel %vm56, %v24, 0.0
    %v59 = vsel %vm57, %v25, 0.0
    %v60 = vadd.f32 %v58, %v59
    %61 = vadd.xlane.f32.xlu0 %v60
    %v62 = vpop.xlane.xlu0 %61
    %v63 = vsub.f32 %v52, %v62
    %v64 = vmul.f32 %v63, %v37
    %vm65 = vcmask 7168
    %v66 = vsel %vm65, %v64, 0.0
    %67 = vadd.xlane.f32.xlu0 %v66
    %v68 = vpop.xlane.xlu0 %67
    %v69 = vrot.slane %v68, 4
    %v70 = vadd.f32 %v68, %v69
    %v71 = vrot.slane %v70, 2
    %v72 = vadd.f32 %v70, %v71
    %v73 = vrot.slane %v72, 1
    %v74 = vadd.f32 %v72, %v73
    %s75 = vtos %v74
    %vm76 = vcmp.eq.s32.totalorder %v28, 0
    %v77 = vstv %s75
    %v78 = vsel %vm76, %v77, 0.0
    %79 = vst [vmem:[#allocation5] sm:$0xff] %v78
    // Predicated region
    $region14: #{tpu_custom_call.1} parent=1 // pred_check
      _
    $region15: #{tpu_custom_call.1} parent=1 // pred_check_branch
      %81 = sbr.rel (0) target = $region17
    $region16: #{tpu_custom_call.1} parent=1 // pred_region
      %s83 = ssub.s32 128, 128
      %84 = vsyncadd [#allocation4], %s83
      %s86 = sshll.u32 [#allocation5], 4
      %s87 = int_to_ptr.vmem [resolvable:$true] %s86
      %89 = dma.vmem_to_hbm [thread:$0]  %s87, 128, %s2, [#allocation4]
    $region17: #{tpu_custom_call.1} parent=1 // pred_fallthru
      _
    // Predicated region
    $region18: #{tpu_custom_call.1} parent=1 // pred_check
      _
    $region19: #{tpu_custom_call.1} parent=1 // pred_check_branch
      %91 = sbr.rel (0) target = $region21
    $region20: #{tpu_custom_call.1} parent=1 // pred_region
      %92 = dma.done [#allocation4], 128
    $region21: #{tpu_custom_call.1} parent=1 // pred_fallthru
      _
    %93 = vsyncpa [#allocation3], 1
    %94 = vsyncpa [#allocation4], 1

</llo_original>
